<compile_context>
chip_gen: v5e
topology: v5e:2x2
jax: 0.10.0
libtpu: 0.0.40
codegen_flags: <defaults>
</compile_context>

<pallas_src>
import jax
import jax.numpy as jnp
from jax.experimental import pallas as pl
from jax.experimental.pallas import tpu as pltpu
import numpy as np


# ---------------------------------------------------------------------------
# Pallas kernel: whole hot path in the transposed (channels, pixels) layout
# ---------------------------------------------------------------------------
def attention_block_kernel(g_ref, x_ref, wg_ref, wx_ref, b_ref, wp_ref, bp_ref,
                           o_ref):
    # g_ref: (F_g, TM)  x_ref: (F_l, TM)  o_ref: (F_l, TM)
    # wg_ref: (F_int, F_g)  wx_ref: (F_int, F_l)   (BN folded, compute dtype)
    # b_ref:  (F_int, 1) fused bg+bx (f32)
    # wp_ref: (F_int, 1) psi weight (f32)   bp_ref: (1, 1) psi bias (f32)
    gv = g_ref[...]                                    # input dtype (bf16/f32)
    xv = x_ref[...]

    # First-stage 1x1 convs on the MXU; bf16 inputs/weights consumed natively,
    # accumulation forced to f32.
    g1 = jnp.dot(wg_ref[...], gv, preferred_element_type=jnp.float32)
    x1 = jnp.dot(wx_ref[...], xv, preferred_element_type=jnp.float32)
    h = jnp.maximum(g1 + x1 + b_ref[...], 0.0)         # (F_int, TM) f32, ReLU

    # psi projection (F_int -> 1) on VPU + sublane reduce (no 1-lane MXU matmul)
    logits = jnp.sum(wp_ref[...] * h, axis=0, keepdims=True) + bp_ref[...]
    psi = jax.nn.sigmoid(logits)                        # (1, TM) f32

    # Final gate: bf16 * f32 promotes to f32; single cast at the store.
    o_ref[...] = (xv * psi).astype(o_ref.dtype)         # lane-dense store


# ---------------------------------------------------------------------------
# Tiling / VMEM sizing
# ---------------------------------------------------------------------------
def _round_up(v, m):
    return ((v + m - 1) // m) * m


def _cdiv(a, b):
    return -(-a // b)


def _vmem_capacity_bytes():
    try:
        cap = getattr(pltpu.get_tpu_info(), "vmem_capacity_bytes", None)
        if cap:
            return int(cap)
    except Exception:
        pass
    return 64 * 1024 * 1024          # conservative default: v7x per-core VMEM


def _choose_tiling(F_g, F_l, F_int, R, N, in_itemsize, tm_max=8192,
                   min_tiles=4):
    """Pick the row-tile width and an explicit VMEM limit.

    Per-column working set = double-buffered (g, x, out) tiles in the transport
    dtype + ~4 f32 intermediate rows of width F_int (g1, x1, h, psi).
    """
    cap = _vmem_capacity_bytes()
    sub = 8 * max(1, 4 // in_itemsize)          # sublane packing for the dtype
    fg_p, fl_p = _round_up(F_g, sub), _round_up(F_l, sub)
    fint_p = _round_up(F_int, 8)
    bytes_per_col = 2 * (fg_p + 2 * fl_p) * in_itemsize + 4 * fint_p * 4

    budget = int(cap * 0.5)                      # leave headroom for scratch
    tm_fit = max(128, min(tm_max, (budget // bytes_per_col) // 128 * 128))
    tm_eff = R if R <= tm_fit else tm_fit        # whole row is always legal

    # v7x megacore: make sure both TensorCores get work when the batch is tiny.
    if R > 128:
        while N * _cdiv(R, tm_eff) < min_tiles:
            new = max(128, ((tm_eff // 2) // 128) * 128)
            if new == tm_eff:
                break
            tm_eff = new

    need = bytes_per_col * tm_eff + (2 << 20)    # params + slack
    vmem_limit = int(min(cap, max(2 * need, 32 * 1024 * 1024)))
    return tm_eff, vmem_limit


# ---------------------------------------------------------------------------
# pallas_call wrapper (transposed layout: channels on sublanes, pixels on lanes)
# ---------------------------------------------------------------------------
def attention_block_pallas(g3, x3, wg, wx, b, wp, bp, *, tm_max=8192):
    """g3: (N, F_g, R), x3: (N, F_l, R) with the pixel axis last (lane axis).

    The kernel is HBM-bandwidth bound (~3 flop/byte): for best throughput hand
    in bf16 NCHW inputs (transport dtype == x dtype; accumulation stays f32).
    Returns (N, F_l, R) in the dtype of x3.
    """
    N, F_g, R = g3.shape
    _, F_l, _ = x3.shape
    F_int = wg.shape[0]

    in_itemsize = max(jnp.dtype(g3.dtype).itemsize, jnp.dtype(x3.dtype).itemsize)
    out_itemsize = jnp.dtype(x3.dtype).itemsize

    tm_eff, vmem_limit = _choose_tiling(F_g, F_l, F_int, R, N, in_itemsize,
                                        tm_max)
    n_row_tiles = _cdiv(R, tm_eff)               # no jnp.pad: partial tail tile

    flops = 2 * F_int * (F_g + F_l + 1) * N * R
    bytes_accessed = ((F_g + F_l) * in_itemsize + F_l * out_itemsize) * N * R

    out = pl.pallas_call(
        attention_block_kernel,
        out_shape=jax.ShapeDtypeStruct((N, F_l, R), x3.dtype),
        grid_spec=pltpu.PrefetchScalarGridSpec(
            num_scalar_prefetch=0,
            grid=(N, n_row_tiles),
            in_specs=[
                pl.BlockSpec((None, F_g, tm_eff), lambda n, j: (n, 0, j)),  # g
                pl.BlockSpec((None, F_l, tm_eff), lambda n, j: (n, 0, j)),  # x
                pl.BlockSpec((F_int, F_g), lambda n, j: (0, 0)),            # Wg
                pl.BlockSpec((F_int, F_l), lambda n, j: (0, 0)),            # Wx
                pl.BlockSpec((F_int, 1), lambda n, j: (0, 0)),              # b
                pl.BlockSpec((F_int, 1), lambda n, j: (0, 0)),              # wp
                pl.BlockSpec((1, 1), lambda n, j: (0, 0)),                  # bp
            ],
            out_specs=pl.BlockSpec((None, F_l, tm_eff), lambda n, j: (n, 0, j)),
        ),
        compiler_params=pltpu.CompilerParams(
            dimension_semantics=("parallel", "parallel"),
            vmem_limit_bytes=vmem_limit),
        cost_estimate=pl.CostEstimate(
            flops=flops, transcendentals=N * R, bytes_accessed=bytes_accessed),
    )(g3, x3, wg, wx, b, wp, bp)
    return out


# ---------------------------------------------------------------------------
# Glue: BN folding, parameter prep, NCHW plumbing (reshape only, no transpose)
# ---------------------------------------------------------------------------
def fold_conv1x1_bn(w, b, gamma, beta, mean, var, eps=1e-5):
    """Fold inference BatchNorm into a 1x1 conv (f32 folding for accuracy)."""
    scale = (gamma / jnp.sqrt(var + eps)).astype(jnp.float32)
    w_f = (w.astype(jnp.float32) * scale[:, None])
    b_f = ((b.astype(jnp.float32) - mean) * scale + beta).astype(jnp.float32)
    return w_f, b_f


def fold_and_pack(params, eps=1e-5):
    wg, bg = fold_conv1x1_bn(params["wg"], params["bg"], params["g_gamma"],
                             params["g_beta"], params["g_mean"],
                             params["g_var"], eps)
    wx, bx = fold_conv1x1_bn(params["wx"], params["bx"], params["x_gamma"],
                             params["x_beta"], params["x_mean"],
                             params["x_var"], eps)
    wp, bp = fold_conv1x1_bn(params["wp"], params["bp"], params["p_gamma"],
                             params["p_beta"], params["p_mean"],
                             params["p_var"], eps)
    b = (bg + bx)[:, None].astype(jnp.float32)        # fused first-stage bias
    wp_col = wp.T.astype(jnp.float32)                 # (F_int, 1)
    bp_arr = bp.reshape(1, 1).astype(jnp.float32)     # (1, 1)
    return wg, wx, b, wp_col, bp_arr


def attention_block_forward(g, x, params, *, tm_max=8192):
    """g, x in NCHW.  Returns NCHW output (x * psi), dtype of x.

    Callers should prefer bf16 inputs for inference: the kernel is HBM-bound,
    so bf16 transport is ~2x on every TPU generation.  Folded weights follow
    the input dtype (bf16 MXU path); all accumulation/epilogue stays f32.
    """
    N, F_g, H, W = g.shape
    _, F_l, _, _ = x.shape
    wg, wx, b, wp, bp = fold_and_pack(params)
    if g.dtype == jnp.bfloat16 and x.dtype == jnp.bfloat16:
        # Fold BN in f32 (above), cast only the folded weights to bf16 so the
        # MXU consumes bf16 directly without an in-kernel upcast of the tiles.
        wg, wx = wg.astype(jnp.bfloat16), wx.astype(jnp.bfloat16)
    # NCHW consumed directly as (N, C, H*W): pure reshape, no HBM transpose.
    g3 = g.reshape(N, F_g, H * W)
    x3 = x.reshape(N, F_l, H * W)
    out3 = attention_block_pallas(g3, x3, wg, wx, b, wp, bp, tm_max=tm_max)
    return out3.reshape(N, F_l, H, W)


# ---------------------------------------------------------------------------
# Test params + pure-JAX reference
# ---------------------------------------------------------------------------
def make_params(key, F_g, F_l, F_int):
    ks = jax.random.split(key, 12)
    p = {}
    p["wg"] = jax.random.normal(ks[0], (F_int, F_g), jnp.float32) * 0.2
    p["bg"] = jax.random.normal(ks[1], (F_int,), jnp.float32) * 0.1
    p["g_gamma"] = 1.0 + 0.1 * jax.random.normal(ks[2], (F_int,), jnp.float32)
    p["g_beta"] = 0.05 * jax.random.normal(ks[3], (F_int,), jnp.float32)
    p["g_mean"] = 0.02 * jax.random.normal(ks[4], (F_int,), jnp.float32)
    p["g_var"] = 1.0 + 0.1 * jnp.abs(jax.random.normal(ks[5], (F_int,), jnp.float32))
    p["wx"] = jax.random.normal(ks[6], (F_int, F_l), jnp.float32) * 0.2
    p["bx"] = jax.random.normal(ks[7], (F_int,), jnp.float32) * 0.1
    p["x_gamma"] = 1.0 + 0.1 * jax.random.normal(ks[8], (F_int,), jnp.float32)
    p["x_beta"] = 0.05 * jax.random.normal(ks[9], (F_int,), jnp.float32)
    p["x_mean"] = 0.02 * jax.random.normal(ks[10], (F_int,), jnp.float32)
    p["x_var"] = 1.0 + 0.1 * jnp.abs(jax.random.normal(ks[11], (F_int,), jnp.float32))
    kp = jax.random.split(ks[0], 6)
    p["wp"] = jax.random.normal(kp[0], (1, F_int), jnp.float32) * 0.2
    p["bp"] = jax.random.normal(kp[1], (1,), jnp.float32) * 0.1
    p["p_gamma"] = 1.0 + 0.1 * jax.random.normal(kp[2], (1,), jnp.float32)
    p["p_beta"] = 0.05 * jax.random.normal(kp[3], (1,), jnp.float32)
    p["p_mean"] = 0.02 * jax.random.normal(kp[4], (1,), jnp.float32)
    p["p_var"] = 1.0 + 0.1 * jnp.abs(jax.random.normal(kp[5], (1,), jnp.float32))
    return p


def reference_forward(g, x, params, eps=1e-5):
    """Pure-JAX reference matching the PyTorch module in eval mode."""
    def conv_bn(inp, w, b, gamma, beta, mean, var):
        z = jnp.einsum("nchw,oc->nohw", inp, w) + b[None, :, None, None]
        s = gamma / jnp.sqrt(var + eps)
        return (z - mean[None, :, None, None]) * s[None, :, None, None] \
               + beta[None, :, None, None]
    g1 = conv_bn(g, params["wg"], params["bg"], params["g_gamma"],
                 params["g_beta"], params["g_mean"], params["g_var"])
    x1 = conv_bn(x, params["wx"], params["bx"], params["x_gamma"],
                 params["x_beta"], params["x_mean"], params["x_var"])
    h = jnp.maximum(g1 + x1, 0.0)
    psi = jax.nn.sigmoid(conv_bn(h, params["wp"], params["bp"],
                                 params["p_gamma"], params["p_beta"],
                                 params["p_mean"], params["p_var"]))
    return x * psi


if __name__ == "__main__":
    key = jax.random.PRNGKey(0)
    k_g, k_x, k_p = jax.random.split(key, 3)

    # Shapes implied by the module: F_g = F_l = 4, F_int = 8, 16x16 spatial.
    N, F_g, F_l, F_int, H, W = 2, 4, 4, 8, 16, 16
    g = jax.random.normal(k_g, (N, F_g, H, W), jnp.float32)
    x = jax.random.normal(k_x, (N, F_l, H, W), jnp.float32)
    params = make_params(k_p, F_g, F_l, F_int)

    # f32 main test.
    out = jax.block_until_ready(attention_block_forward(g, x, params))
    ref = jax.block_until_ready(reference_forward(g, x, params))
    np.testing.assert_allclose(np.asarray(out), np.asarray(ref),
                               rtol=1e-5, atol=1e-5)

    # Ragged spatial size (H*W = 225) exercising the partial-tail-tile path
    # (the megacore split picks tm=128 -> grid (2, 2) with a 97-wide tail).
    H2 = W2 = 15
    g2 = jax.random.normal(k_g, (N, F_g, H2, W2), jnp.float32)
    x2 = jax.random.normal(k_x, (N, F_l, H2, W2), jnp.float32)
    out2 = jax.block_until_ready(attention_block_forward(g2, x2, params))
    ref2 = jax.block_until_ready(reference_forward(g2, x2, params))
    np.testing.assert_allclose(np.asarray(out2), np.asarray(ref2),
                               rtol=1e-5, atol=1e-5)

    # bf16 transport + bf16 folded weights on the MXU; epilogue stays f32.
    g_bf = g.astype(jnp.bfloat16)
    x_bf = x.astype(jnp.bfloat16)
    out_bf = jax.block_until_ready(attention_block_forward(g_bf, x_bf, params))
    ref_bf = reference_forward(g_bf.astype(jnp.float32),
                               x_bf.astype(jnp.float32), params)
    np.testing.assert_allclose(np.asarray(out_bf.astype(jnp.float32)),
                               np.asarray(ref_bf), rtol=3e-2, atol=3e-2)

    print("KERNEL_OK")
</pallas_src>

<mosaic_0001>
module attributes {stable_mosaic.version = 11 : i64} {
  func.func @attention_block_kernel(%arg0: i32, %arg1: i32, %arg2: memref<1x4x128xf32, #tpu.memory_space<vmem>>, %arg3: memref<1x4x128xf32, #tpu.memory_space<vmem>>, %arg4: memref<8x4xf32, #tpu.memory_space<vmem>>, %arg5: memref<8x4xf32, #tpu.memory_space<vmem>>, %arg6: memref<8x1xf32, #tpu.memory_space<vmem>>, %arg7: memref<8x1xf32, #tpu.memory_space<vmem>>, %arg8: memref<1x1xf32, #tpu.memory_space<vmem>>, %arg9: memref<1x4x128xf32, #tpu.memory_space<vmem>>) attributes {dimension_semantics = [#tpu.dimension_semantics<parallel>, #tpu.dimension_semantics<parallel>], iteration_bounds = array<i64: 2, 2>, scalar_prefetch = 0 : i64, scratch_operands = 0 : i64, tpu.core_type = #tpu.core_type<tc>, window_params = [{transform_indices = @transform_0, window_bounds = array<i64: 1, 4, 128>}, {transform_indices = @transform_1, window_bounds = array<i64: 1, 4, 128>}, {pipeline_mode = #tpu.pipeline_mode<synchronous>, transform_indices = @transform_2, window_bounds = array<i64: 8, 4>}, {pipeline_mode = #tpu.pipeline_mode<synchronous>, transform_indices = @transform_3, window_bounds = array<i64: 8, 4>}, {pipeline_mode = #tpu.pipeline_mode<synchronous>, transform_indices = @transform_4, window_bounds = array<i64: 8, 1>}, {pipeline_mode = #tpu.pipeline_mode<synchronous>, transform_indices = @transform_5, window_bounds = array<i64: 8, 1>}, {pipeline_mode = #tpu.pipeline_mode<synchronous>, transform_indices = @transform_6, window_bounds = array<i64: 1, 1>}, {transform_indices = @transform_7, window_bounds = array<i64: 1, 4, 128>}]} {
    %c0 = arith.constant 0 : index
    %c0_0 = arith.constant 0 : index
    %c0_1 = arith.constant 0 : index
    %0 = vector.load %arg2[%c0, %c0_0, %c0_1] : memref<1x4x128xf32, #tpu.memory_space<vmem>>, vector<1x4x128xf32>
    %1 = vector.shape_cast %0 : vector<1x4x128xf32> to vector<4x128xf32>
    %c0_2 = arith.constant 0 : index
    %c0_3 = arith.constant 0 : index
    %c0_4 = arith.constant 0 : index
    %2 = vector.load %arg3[%c0_2, %c0_3, %c0_4] : memref<1x4x128xf32, #tpu.memory_space<vmem>>, vector<1x4x128xf32>
    %3 = vector.shape_cast %2 : vector<1x4x128xf32> to vector<4x128xf32>
    %c0_5 = arith.constant 0 : index
    %c0_6 = arith.constant 0 : index
    %4 = vector.load %arg4[%c0_5, %c0_6] : memref<8x4xf32, #tpu.memory_space<vmem>>, vector<8x4xf32>
    %cst = arith.constant dense<0.000000e+00> : vector<8x128xf32>
    %5 = tpu.matmul %4, %1, %cst {dimension_numbers = #tpu.dot_dimension_numbers<[1], [0], [0], [1], [0, 0, 1, 1], [], []>} : vector<8x4xf32>, vector<4x128xf32>, vector<8x128xf32> -> vector<8x128xf32>
    %c0_7 = arith.constant 0 : index
    %c0_8 = arith.constant 0 : index
    %6 = vector.load %arg5[%c0_7, %c0_8] : memref<8x4xf32, #tpu.memory_space<vmem>>, vector<8x4xf32>
    %cst_9 = arith.constant dense<0.000000e+00> : vector<8x128xf32>
    %7 = tpu.matmul %6, %3, %cst_9 {dimension_numbers = #tpu.dot_dimension_numbers<[1], [0], [0], [1], [0, 0, 1, 1], [], []>} : vector<8x4xf32>, vector<4x128xf32>, vector<8x128xf32> -> vector<8x128xf32>
    %8 = arith.addf %5, %7 : vector<8x128xf32>
    %c0_10 = arith.constant 0 : index
    %c0_11 = arith.constant 0 : index
    %9 = vector.load %arg6[%c0_10, %c0_11] : memref<8x1xf32, #tpu.memory_space<vmem>>, vector<8x1xf32>
    %10 = vector.broadcast %9 : vector<8x1xf32> to vector<8x128xf32>
    %11 = arith.addf %8, %10 : vector<8x128xf32>
    %cst_12 = arith.constant 0.000000e+00 : f32
    %12 = vector.broadcast %cst_12 : f32 to vector<8x128xf32>
    %13 = arith.maximumf %11, %12 : vector<8x128xf32>
    %c0_13 = arith.constant 0 : index
    %c0_14 = arith.constant 0 : index
    %14 = vector.load %arg7[%c0_13, %c0_14] : memref<8x1xf32, #tpu.memory_space<vmem>>, vector<8x1xf32>
    %15 = vector.broadcast %14 : vector<8x1xf32> to vector<8x128xf32>
    %16 = arith.mulf %15, %13 : vector<8x128xf32>
    %cst_15 = arith.constant dense<0.000000e+00> : vector<128xf32>
    %17 = vector.multi_reduction <add>, %16, %cst_15 [0] : vector<8x128xf32> to vector<128xf32>
    %18 = vector.shape_cast %17 : vector<128xf32> to vector<1x128xf32>
    %c0_16 = arith.constant 0 : index
    %c0_17 = arith.constant 0 : index
    %19 = vector.load %arg8[%c0_16, %c0_17] : memref<1x1xf32, #tpu.memory_space<vmem>>, vector<1x1xf32>
    %20 = vector.broadcast %19 : vector<1x1xf32> to vector<1x128xf32>
    %21 = arith.addf %18, %20 : vector<1x128xf32>
    %22 = arith.negf %21 : vector<1x128xf32>
    %23 = math.exp %22 : vector<1x128xf32>
    %cst_18 = arith.constant 1.000000e+00 : f32
    %24 = vector.broadcast %cst_18 : f32 to vector<1x128xf32>
    %25 = arith.addf %24, %23 : vector<1x128xf32>
    %26 = arith.divf %24, %25 : vector<1x128xf32>
    %27 = vector.broadcast %26 : vector<1x128xf32> to vector<4x128xf32>
    %28 = arith.mulf %3, %27 : vector<4x128xf32>
    %c0_19 = arith.constant 0 : index
    %c0_20 = arith.constant 0 : index
    %c0_21 = arith.constant 0 : index
    %29 = vector.load %arg9[%c0_19, %c0_20, %c0_21] : memref<1x4x128xf32, #tpu.memory_space<vmem>>, vector<1x4x128xf32>
    %30 = vector.shape_cast %29 : vector<1x4x128xf32> to vector<4x128xf32>
    %31 = vector.shape_cast %28 : vector<4x128xf32> to vector<1x4x128xf32>
    tpu.vector_store %arg9[%c0_19, %c0_20, %c0_21], %31 {strides = array<i32>} : memref<1x4x128xf32, #tpu.memory_space<vmem>>, vector<1x4x128xf32>,
    return
  }
  func.func @transform_0(%arg0: i32, %arg1: i32) -> (i32, i32, i32) {
    %c0_i32 = arith.constant 0 : i32
    %c0_i32_0 = arith.constant 0 : i32
    return %arg0, %c0_i32, %arg1 : i32, i32, i32
  }
  func.func @transform_1(%arg0: i32, %arg1: i32) -> (i32, i32, i32) {
    %c0_i32 = arith.constant 0 : i32
    %c0_i32_0 = arith.constant 0 : i32
    return %arg0, %c0_i32, %arg1 : i32, i32, i32
  }
  func.func @transform_2(%arg0: i32, %arg1: i32) -> (i32, i32) {
    %c0_i32 = arith.constant 0 : i32
    %c0_i32_0 = arith.constant 0 : i32
    %c0_i32_1 = arith.constant 0 : i32
    return %c0_i32, %c0_i32_0 : i32, i32
  }
  func.func @transform_3(%arg0: i32, %arg1: i32) -> (i32, i32) {
    %c0_i32 = arith.constant 0 : i32
    %c0_i32_0 = arith.constant 0 : i32
    %c0_i32_1 = arith.constant 0 : i32
    return %c0_i32, %c0_i32_0 : i32, i32
  }
  func.func @transform_4(%arg0: i32, %arg1: i32) -> (i32, i32) {
    %c0_i32 = arith.constant 0 : i32
    %c0_i32_0 = arith.constant 0 : i32
    %c0_i32_1 = arith.constant 0 : i32
    return %c0_i32, %c0_i32_0 : i32, i32
  }
  func.func @transform_5(%arg0: i32, %arg1: i32) -> (i32, i32) {
    %c0_i32 = arith.constant 0 : i32
    %c0_i32_0 = arith.constant 0 : i32
    %c0_i32_1 = arith.constant 0 : i32
    return %c0_i32, %c0_i32_0 : i32, i32
  }
  func.func @transform_6(%arg0: i32, %arg1: i32) -> (i32, i32) {
    %c0_i32 = arith.constant 0 : i32
    %c0_i32_0 = arith.constant 0 : i32
    %c0_i32_1 = arith.constant 0 : i32
    return %c0_i32, %c0_i32_0 : i32, i32
  }
  func.func @transform_7(%arg0: i32, %arg1: i32) -> (i32, i32, i32) {
    %c0_i32 = arith.constant 0 : i32
    %c0_i32_0 = arith.constant 0 : i32
    return %arg0, %c0_i32, %arg1 : i32, i32, i32
  }
}

</mosaic_0001>

<llo_original>
// kernel: tpu_custom_call.1
$region0: #{tpu_custom_call.1}
  #allocation0 [shape = 'u32[]', space=smem, size = 0x4, offset = 0x4, fixed_abs, tag = 'smem constant byte address 0x4 - core index']
  #allocation1 [shape = 'u32[72,128]{1,0:T(1,128)}', space=vmem, size = 0x9000, scoped, tag = 'internal scratch']
  #allocation2 [shape = 'f32[1,1]{1,0:T(1,128)S(1)}', space=vmem, size = 0x200, scoped, tag = 'scoped memory for tpu_custom_call.1']
  %s0 = inlined_call_operand.vmem [shape: f32[2,4,256], index: 0, kind: input, shape index: {}]
  %s1 = inlined_call_operand.vmem [shape: f32[2,4,256], index: 1, kind: input, shape index: {}]
  %s2 = inlined_call_operand.vmem [shape: f32[8,4], index: 2, kind: input, shape index: {}]
  %s3 = inlined_call_operand.vmem [shape: f32[8,4], index: 3, kind: input, shape index: {}]
  %s4 = inlined_call_operand.vmem [shape: f32[8,1], index: 4, kind: input, shape index: {}]
  %s5 = inlined_call_operand.vmem [shape: f32[8,1], index: 5, kind: input, shape index: {}]
  %s6 = inlined_call_operand.<no memory space> [shape: f32[1,1], index: 6, kind: input, shape index: {}]
  %s7 = inlined_call_operand.hbm [shape: f32[2,4,256], index: 7, kind: output, shape index: {}]
  %s8 = sld [smem:[#allocation0]]
  $region61: #{tpu_custom_call.1} parent=0
    _
  %s10 = ssub.s32 1, %s8
  %s11 = scalar_select 0, %s10, %s8
  %v12 = vstv %s6
  %13 = vst [vmem:[#allocation2] sm:$0x1] %v12
  $region1: #{tpu_custom_call.1} parent=0
    #allocation3 [shape = 'u8[4096]{0}', space=vmem, size = 0x1000, scoped, tag = 'output window, operand 0']
    #allocation4 [shape = 's32[2]{0}', space=sflag, size = 0x8, scoped, tag = 'scoped memory for tpu_custom_call.1']
    %14 = vsyncpa [#allocation4], 0
    %s15 = scalar_lea.sflag [#allocation4], 1
    %16 = vsyncpa %s15, 0
    loop: start=0, step=1, limit=6
    $region2: #{tpu_custom_call.1} parent=1 // loop_pre_header
      _
    $region3: #{tpu_custom_call.1} parent=1 // loop_header
      %s18 = sphi 0, %s22
      %p19 = scmp.ge.s32.totalorder %s18, 6
      %s25 = sphi 0, %s37
      %s26 = sphi 0, %s33
      %s27 = sphi 0, %s25
      %s28 = sphi 0, %s26
      %s29 = sphi 0, %s27
      %s30 = sphi 0, %s28
      %s42 = sphi 0, %s44
      %s45 = sphi 0, %s42
      %s46 = sphi 0, %s45
      %s62 = sphi 0, %s46
      %s70 = sphi 0, %s72
      %s73 = sphi 0, %s70
      %s74 = sphi 0, %s73
      %s90 = sphi 0, %s74
      %s94 = sphi 0, %s94
      %s96 = sphi 0, %s94
      %s97 = sphi 0, %s96
      %s111 = sphi 0, %s97
      %s115 = sphi 0, %s115
      %s117 = sphi 0, %s115
      %s118 = sphi 0, %s117
      %s132 = sphi 0, %s118
      %s136 = sphi 0, %s136
      %s138 = sphi 0, %s136
      %s139 = sphi 0, %s138
      %s153 = sphi 0, %s139
      %s157 = sphi 0, %s157
      %s159 = sphi 0, %s157
      %s160 = sphi 0, %s159
      %s174 = sphi 0, %s160
      %s178 = sphi 0, %s178
      %s180 = sphi 0, %s178
      %s181 = sphi 0, %s180
      %s195 = sphi 0, %s181
      %s203 = sphi 0, %s205
      %s206 = sphi 0, %s203
      %s207 = sphi 0, %s206
      %s223 = sphi 0, %s207
    $region4: #{tpu_custom_call.1} parent=1 // loop_header_branch
      %21 = sbr.rel (%p19) target = $region8
    $region5: #{tpu_custom_call.1} parent=1 // loop_body
      %s23 = ssub.s32 %s18, 1
      %s24 = ssub.s32 %s18, 2
      %s31 = sadd.s32 1, %s26
      %p32 = scmp.ge.s32.totalorder %s31, 2
      %s33 = scalar_select %p32, 0, %s31
      %s34 = sadd.s32 1, %s25
      %s35 = scalar_select %p32, %s34, %s25
      %p36 = scmp.ge.s32.totalorder %s35, 2
      %s37 = scalar_select %p36, 0, %s35
      %s38 = ssub.s32 %s25, %s37
      %s39 = ssub.s32 %s26, %s33
      %s40 = sor.u32 %s38, %s39
      %p41 = scmp.eq.s32.totalorder %s40, 0
      %s43 = sadd.s32 %s42, 1
      %s44 = scalar_select %p41, %s42, %s43
      %p47 = pneg %p41
      %p48 = scmp.eq.s32.totalorder %s18, 3
      %p49 = por %p47, %p48
      %p50 = scmp.ne.s32.totalorder %s42, %s45
      %p51 = scmp.eq.s32.totalorder %s18, 0
      %p52 = por %p50, %p51
      %p53 = scmp.ne.s32.totalorder %s42, %s45
      %p54 = scmp.eq.s32.totalorder %s23, 3
      %p55 = por %p53, %p54
      %p56 = scmp.ne.s32.totalorder %s45, %s46
      %p57 = scmp.eq.s32.totalorder %s23, 0
      %p58 = por %p56, %p57
      %p59 = scmp.ne.s32.totalorder %s45, %s46
      %p60 = scmp.eq.s32.totalorder %s24, 3
      %p61 = por %p59, %p60
      %p63 = scmp.ne.s32.totalorder %s46, %s62
      %p64 = scmp.eq.s32.totalorder %s24, 0
      %p65 = por %p63, %p64
      %s66 = ssub.s32 %s25, %s37
      %s67 = ssub.s32 %s26, %s33
      %s68 = sor.u32 %s66, %s67
      %p69 = scmp.eq.s32.totalorder %s68, 0
      %s71 = sadd.s32 %s70, 1
      %s72 = scalar_select %p69, %s70, %s71
      %p75 = pneg %p69
      %p76 = scmp.eq.s32.totalorder %s18, 3
      %p77 = por %p75, %p76
      %p78 = scmp.ne.s32.totalorder %s70, %s73
      %p79 = scmp.eq.s32.totalorder %s18, 0
      %p80 = por %p78, %p79
      %p81 = scmp.ne.s32.totalorder %s70, %s73
      %p82 = scmp.eq.s32.totalorder %s23, 3
      %p83 = por %p81, %p82
      %p84 = scmp.ne.s32.totalorder %s73, %s74
      %p85 = scmp.eq.s32.totalorder %s23, 0
      %p86 = por %p84, %p85
      %p87 = scmp.ne.s32.totalorder %s73, %s74
      %p88 = scmp.eq.s32.totalorder %s24, 3
      %p89 = por %p87, %p88
      %p91 = scmp.ne.s32.totalorder %s74, %s90
      %p92 = scmp.eq.s32.totalorder %s24, 0
      %p93 = por %p91, %p92
      %s95 = sadd.s32 %s94, 1
      %p98 = scmp.eq.s32.totalorder %s18, 3
      %p99 = scmp.ne.s32.totalorder %s94, %s96
      %p100 = scmp.eq.s32.totalorder %s18, 0
      %p101 = por %p99, %p100
      %p102 = scmp.ne.s32.totalorder %s94, %s96
      %p103 = scmp.eq.s32.totalorder %s23, 3
      %p104 = por %p102, %p103
      %p105 = scmp.ne.s32.totalorder %s96, %s97
      %p106 = scmp.eq.s32.totalorder %s23, 0
      %p107 = por %p105, %p106
      %p108 = scmp.ne.s32.totalorder %s96, %s97
      %p109 = scmp.eq.s32.totalorder %s24, 3
      %p110 = por %p108, %p109
      %p112 = scmp.ne.s32.totalorder %s97, %s111
      %p113 = scmp.eq.s32.totalorder %s24, 0
      %p114 = por %p112, %p113
      %s116 = sadd.s32 %s115, 1
      %p119 = scmp.eq.s32.totalorder %s18, 3
      %p120 = scmp.ne.s32.totalorder %s115, %s117
      %p121 = scmp.eq.s32.totalorder %s18, 0
      %p122 = por %p120, %p121
      %p123 = scmp.ne.s32.totalorder %s115, %s117
      %p124 = scmp.eq.s32.totalorder %s23, 3
      %p125 = por %p123, %p124
      %p126 = scmp.ne.s32.totalorder %s117, %s118
      %p127 = scmp.eq.s32.totalorder %s23, 0
      %p128 = por %p126, %p127
      %p129 = scmp.ne.s32.totalorder %s117, %s118
      %p130 = scmp.eq.s32.totalorder %s24, 3
      %p131 = por %p129, %p130
      %p133 = scmp.ne.s32.totalorder %s118, %s132
      %p134 = scmp.eq.s32.totalorder %s24, 0
      %p135 = por %p133, %p134
      %s137 = sadd.s32 %s136, 1
      %p140 = scmp.eq.s32.totalorder %s18, 3
      %p141 = scmp.ne.s32.totalorder %s136, %s138
      %p142 = scmp.eq.s32.totalorder %s18, 0
      %p143 = por %p141, %p142
      %p144 = scmp.ne.s32.totalorder %s136, %s138
      %p145 = scmp.eq.s32.totalorder %s23, 3
      %p146 = por %p144, %p145
      %p147 = scmp.ne.s32.totalorder %s138, %s139
      %p148 = scmp.eq.s32.totalorder %s23, 0
      %p149 = por %p147, %p148
      %p150 = scmp.ne.s32.totalorder %s138, %s139
      %p151 = scmp.eq.s32.totalorder %s24, 3
      %p152 = por %p150, %p151
      %p154 = scmp.ne.s32.totalorder %s139, %s153
      %p155 = scmp.eq.s32.totalorder %s24, 0
      %p156 = por %p154, %p155
      %s158 = sadd.s32 %s157, 1
      %p161 = scmp.eq.s32.totalorder %s18, 3
      %p162 = scmp.ne.s32.totalorder %s157, %s159
      %p163 = scmp.eq.s32.totalorder %s18, 0
      %p164 = por %p162, %p163
      %p165 = scmp.ne.s32.totalorder %s157, %s159
      %p166 = scmp.eq.s32.totalorder %s23, 3
      %p167 = por %p165, %p166
      %p168 = scmp.ne.s32.totalorder %s159, %s160
      %p169 = scmp.eq.s32.totalorder %s23, 0
      %p170 = por %p168, %p169
      %p171 = scmp.ne.s32.totalorder %s159, %s160
      %p172 = scmp.eq.s32.totalorder %s24, 3
      %p173 = por %p171, %p172
      %p175 = scmp.ne.s32.totalorder %s160, %s174
      %p176 = scmp.eq.s32.totalorder %s24, 0
      %p177 = por %p175, %p176
      %s179 = sadd.s32 %s178, 1
      %p182 = scmp.eq.s32.totalorder %s18, 3
      %p183 = scmp.ne.s32.totalorder %s178, %s180
      %p184 = scmp.eq.s32.totalorder %s18, 0
      %p185 = por %p183, %p184
      %p186 = scmp.ne.s32.totalorder %s178, %s180
      %p187 = scmp.eq.s32.totalorder %s23, 3
      %p188 = por %p186, %p187
      %p189 = scmp.ne.s32.totalorder %s180, %s181
      %p190 = scmp.eq.s32.totalorder %s23, 0
      %p191 = por %p189, %p190
      %p192 = scmp.ne.s32.totalorder %s180, %s181
      %p193 = scmp.eq.s32.totalorder %s24, 3
      %p194 = por %p192, %p193
      %p196 = scmp.ne.s32.totalorder %s181, %s195
      %p197 = scmp.eq.s32.totalorder %s24, 0
      %p198 = por %p196, %p197
      %s199 = ssub.s32 %s25, %s37
      %s200 = ssub.s32 %s26, %s33
      %s201 = sor.u32 %s199, %s200
      %p202 = scmp.eq.s32.totalorder %s201, 0
      %s204 = sadd.s32 %s203, 1
      %s205 = scalar_select %p202, %s203, %s204
      %p208 = pneg %p202
      %p209 = scmp.eq.s32.totalorder %s18, 3
      %p210 = por %p208, %p209
      %p211 = scmp.ne.s32.totalorder %s203, %s206
      %p212 = scmp.eq.s32.totalorder %s18, 0
      %p213 = por %p211, %p212
      %p214 = scmp.ne.s32.totalorder %s203, %s206
      %p215 = scmp.eq.s32.totalorder %s23, 3
      %p216 = por %p214, %p215
      %p217 = scmp.ne.s32.totalorder %s206, %s207
      %p218 = scmp.eq.s32.totalorder %s23, 0
      %p219 = por %p217, %p218
      %p220 = scmp.ne.s32.totalorder %s206, %s207
      %p221 = scmp.eq.s32.totalorder %s24, 3
      %p222 = por %p220, %p221
      %p224 = scmp.ne.s32.totalorder %s207, %s223
      %p225 = scmp.eq.s32.totalorder %s24, 0
      %p226 = por %p224, %p225
      %p227 = scmp.le.s32.totalorder 1, %s18
      %p228 = scmp.lt.s32.totalorder %s18, 5
      %p229 = pnand %p227, %p228
      %p230 = pneg %p229
      // Predicated region
      $region9: #{tpu_custom_call.1} parent=5 // pred_check
        _
      $region10: #{tpu_custom_call.1} parent=5 // pred_check_branch
        %232 = sbr.rel (%p229) target = $region12
      $region11: #{tpu_custom_call.1} parent=5 // pred_region
        %s233 = ssub.s32 %s18, 1
        // Predicated region
        $region13: #{tpu_custom_call.1} parent=11 // pred_check
          %p234 = pneg %p107
        $region14: #{tpu_custom_call.1} parent=11 // pred_check_branch
          %236 = sbr.rel (%p234) target = $region16
        $region15: #{tpu_custom_call.1} parent=11 // pred_region
          _
        $region16: #{tpu_custom_call.1} parent=11 // pred_fallthru
          _
        // Predicated region
        $region17: #{tpu_custom_call.1} parent=11 // pred_check
          %p237 = pneg %p128
        $region18: #{tpu_custom_call.1} parent=11 // pred_check_branch
          %239 = sbr.rel (%p237) target = $region20
        $region19: #{tpu_custom_call.1} parent=11 // pred_region
          _
        $region20: #{tpu_custom_call.1} parent=11 // pred_fallthru
          _
        // Predicated region
        $region21: #{tpu_custom_call.1} parent=11 // pred_check
          %p240 = pneg %p149
        $region22: #{tpu_custom_call.1} parent=11 // pred_check_branch
          %242 = sbr.rel (%p240) target = $region24
        $region23: #{tpu_custom_call.1} parent=11 // pred_region
          _
        $region24: #{tpu_custom_call.1} parent=11 // pred_fallthru
          _
        // Predicated region
        $region25: #{tpu_custom_call.1} parent=11 // pred_check
          %p243 = pneg %p170
        $region26: #{tpu_custom_call.1} parent=11 // pred_check_branch
          %245 = sbr.rel (%p243) target = $region28
        $region27: #{tpu_custom_call.1} parent=11 // pred_region
          _
        $region28: #{tpu_custom_call.1} parent=11 // pred_fallthru
          _
        // Predicated region
        $region29: #{tpu_custom_call.1} parent=11 // pred_check
          %p246 = pneg %p191
        $region30: #{tpu_custom_call.1} parent=11 // pred_check_branch
          %248 = sbr.rel (%p246) target = $region32
        $region31: #{tpu_custom_call.1} parent=11 // pred_region
          _
        $region32: #{tpu_custom_call.1} parent=11 // pred_fallthru
          _
      $region12: #{tpu_custom_call.1} parent=5 // pred_fallthru
        _
      %p249 = scmp.lt.s32.totalorder %s18, 4
      // Predicated region
      $region33: #{tpu_custom_call.1} parent=5 // pred_check
        %p250 = pneg %p249
      $region34: #{tpu_custom_call.1} parent=5 // pred_check_branch
        %252 = sbr.rel (%p250) target = $region36
      $region35: #{tpu_custom_call.1} parent=5 // pred_region
        // Predicated region
        $region37: #{tpu_custom_call.1} parent=35 // pred_check
          %p253 = pneg %p52
        $region38: #{tpu_custom_call.1} parent=35 // pred_check_branch
          %255 = sbr.rel (%p253) target = $region40
        $region39: #{tpu_custom_call.1} parent=35 // pred_region
          %p256 = scmp.lt.s32.totalorder %s25, 1
          %s257 = scalar_select %p256, %s25, 1
          %p258 = scmp.lt.s32.totalorder %s26, 1
          %s259 = scalar_select %p258, %s26, 1
          %s260 = smul.addr %s257, 2
          %s261 = sadd.s32 %s259, %s260
          %s262 = smul.addr %s261, 4
          %s263 = scalar_lea.vmem %s0, %s262
        $region40: #{tpu_custom_call.1} parent=35 // pred_fallthru
          _
        // Predicated region
        $region41: #{tpu_custom_call.1} parent=35 // pred_check
          %p264 = pneg %p80
        $region42: #{tpu_custom_call.1} parent=35 // pred_check_branch
          %266 = sbr.rel (%p264) target = $region44
        $region43: #{tpu_custom_call.1} parent=35 // pred_region
          %p267 = scmp.lt.s32.totalorder %s25, 1
          %s268 = scalar_select %p267, %s25, 1
          %p269 = scmp.lt.s32.totalorder %s26, 1
          %s270 = scalar_select %p269, %s26, 1
          %s271 = smul.addr %s268, 2
          %s272 = sadd.s32 %s270, %s271
          %s273 = smul.addr %s272, 4
          %s274 = scalar_lea.vmem %s1, %s273
        $region44: #{tpu_custom_call.1} parent=35 // pred_fallthru
          _
      $region36: #{tpu_custom_call.1} parent=5 // pred_fallthru
        _
      %p275 = scmp.le.s32.totalorder 1, %s18
      %p276 = scmp.lt.s32.totalorder %s18, 5
      %p277 = pnand %p275, %p276
      %p278 = pneg %p277
      // Predicated region
      $region45: #{tpu_custom_call.1} parent=5 // pred_check
        _
      $region46: #{tpu_custom_call.1} parent=5 // pred_check_branch
        %280 = sbr.rel (%p277) target = $region48
      $region47: #{tpu_custom_call.1} parent=5 // pred_region
        %s281 = ssub.s32 %s18, 1
        %p282 = scmp.lt.s32.totalorder %s27, 1
        %s283 = scalar_select %p282, %s27, 1
        %p284 = scmp.lt.s32.totalorder %s28, 1
        %s285 = scalar_select %p284, %s28, 1
        %s286 = smul.addr %s283, 2
        %s287 = sadd.s32 %s285, %s286
        %s288 = smul.addr %s287, 4
        %s289 = scalar_lea.vmem %s0, %s288
        %p290 = pneg %p58
        %p291 = pneg %p55
        %p292 = scmp.lt.s32.totalorder %s27, 1
        %s293 = scalar_select %p292, %s27, 1
        %p294 = scmp.lt.s32.totalorder %s28, 1
        %s295 = scalar_select %p294, %s28, 1
        %s296 = smul.addr %s293, 2
        %s297 = sadd.s32 %s295, %s296
        %s298 = smul.addr %s297, 4
        %s299 = scalar_lea.vmem %s1, %s298
        %p300 = pneg %p86
        %p301 = pneg %p83
        %p302 = pneg %p107
        %p303 = pneg %p104
        %p304 = pneg %p128
        %p305 = pneg %p125
        %p306 = pneg %p149
        %p307 = pneg %p146
        %p308 = pneg %p170
        %p309 = pneg %p167
        %p310 = pneg %p191
        %p311 = pneg %p188
        %p312 = pneg %p219
        %p313 = pneg %p216
        %s314 = sand.u32 %s206, 1
        %s315 = scalar_lea.sflag [#allocation4], %s314
        %s316 = sand.u32 %s206, 1
        %s317 = smul.addr %s316, 4
        %s318 = scalar_lea.vmem [#allocation3], %s317
        %p319 = scmp.lt.s32.totalorder %s27, 1
        %s320 = scalar_select %p319, %s27, 1
        %p321 = scmp.lt.s32.totalorder %s28, 1
        %s322 = scalar_select %p321, %s28, 1
        %s323 = smul.addr %s320, 2
        %s324 = sadd.s32 %s322, %s323
        %s325 = smul.addr %s324, 4
        %s326 = scalar_lea.vmem %s0, %s325
        %p327 = scmp.lt.s32.totalorder %s27, 1
        %s328 = scalar_select %p327, %s27, 1
        %p329 = scmp.lt.s32.totalorder %s28, 1
        %s330 = scalar_select %p329, %s28, 1
        %s331 = smul.addr %s328, 2
        %s332 = sadd.s32 %s330, %s331
        %s333 = smul.addr %s332, 4
        %s334 = scalar_lea.vmem %s1, %s333
        %v335 = vld [vmem:[%s326] sm:$0xf]
        %v336 = vld [vmem:[%s334] sm:$0xf]
        %v337 = vld [vmem:[%s2] sm:$0xff]
        %v338 = vld [vmem:[%s3] sm:$0xff]
        %vm339 = vcmask 31744
        %v341 = vsel %vm339, %v338, 0
        %vm343 = vcmask 1043456
        %v345 = vsel %vm343, %v336, 0
        %347 = vmatpush.msra.mxu0 0.0
        %348 = vmatpush.msra.mxu0 0.0
        %349 = vmatpush.msra.mxu0 0.0
        %350 = vmatpush.msra.mxu0 0.0
        %351 = vmatpush.msra.mxu0 0.0
        %352 = vmatpush.msra.mxu0 0.0
        %353 = vmatpush.msra.mxu0 0.0
        %354 = vmatpush.msra.mxu0 0.0
        %355 = vmatpush.msra.mxu0 0.0
        %356 = vmatpush.msra.mxu0 0.0
        %357 = vmatpush.msra.mxu0 0.0
        %358 = vmatpush.msra.mxu0 0.0
        %359 = vmatpush.msra.mxu0 0.0
        %360 = vmatpush.msra.mxu0 0.0
        %361 = vmatpush.msra.mxu0 0.0
        %362 = vmatpush.msra.mxu0 %v345
        %363 = vmatmul.f32.gmra.mxu0 %v341
        %v364 = vpop.f32.mrf.mxu0
        %v365 = vadd.f32 0.0, %v364
        %366 = vdwg.mxu0
        %v368 = vsel %vm339, %v337, 0
        %v371 = vsel %vm343, %v335, 0
        %373 = vmatpush.msra.mxu0 0.0
        %374 = vmatpush.msra.mxu0 0.0
        %375 = vmatpush.msra.mxu0 0.0
        %376 = vmatpush.msra.mxu0 0.0
        %377 = vmatpush.msra.mxu0 0.0
        %378 = vmatpush.msra.mxu0 0.0
        %379 = vmatpush.msra.mxu0 0.0
        %380 = vmatpush.msra.mxu0 0.0
        %381 = vmatpush.msra.mxu0 0.0
        %382 = vmatpush.msra.mxu0 0.0
        %383 = vmatpush.msra.mxu0 0.0
        %384 = vmatpush.msra.mxu0 0.0
        %385 = vmatpush.msra.mxu0 0.0
        %386 = vmatpush.msra.mxu0 0.0
        %387 = vmatpush.msra.mxu0 0.0
        %388 = vmatpush.msra.mxu0 %v371
        %389 = vmatmul.f32.gmra.mxu0 %v368
        %v390 = vpop.f32.mrf.mxu0
        %v391 = vadd.f32 %v365, %v390
        %392 = vdwg.mxu0
        %v393 = vld [vmem:[%s4] sm:$0xff]
        %395 = vset.pattern.permute.xlu0 0
        %396 = vperm.xlu0 %395, %v393
        %v397 = vpop.permute.xlu0 %396
        %v399 = vadd.f32 %v391, %v397
        %v400 = vmax.f32 %v399, 0.0
        %v401 = vld [vmem:[%s5] sm:$0xff]
        %403 = vset.pattern.permute.xlu0 0
        %404 = vperm.xlu0 %403, %v401
        %v405 = vpop.permute.xlu0 %404
        %v407 = vmul.f32 %v405, %v400
        %v408 = vrot.slane %v407, 4
        %v409 = vadd.f32 %v407, %v408
        %v410 = vrot.slane %v409, 2
        %v411 = vadd.f32 %v409, %v410
        %v412 = vrot.slane %v411, 1
        %v413 = vadd.f32 %v411, %v412
        %v414 = vld [vmem:[#allocation2] sm:$0x1]
        %416 = vset.pattern.permute.xlu0 0
        %417 = vperm.xlu0 %416, %v414
        %v418 = vpop.permute.xlu0 %417
        %v420 = vperm.slane %v418, 0
        %v421 = vadd.f32 %v413, %v420
        %v422 = vxor.u32 %v421, 2147483648
        %v423 = vmul.f32 %v422, 1.442695
        %v424 = vpow.pop %v423
        %v425 = vadd.f32 %v424, 1.0
        %v426 = vrcp.pop %v425
        %v427 = vmul.f32 %v425, %v426
        %v428 = vsub.f32 1.0, %v427
        %v429 = vmul.f32 %v426, %v428
        %v430 = vadd.f32 %v426, %v429
        %vm431 = vweird.f32 %v425
        %vm432 = vweird.f32 %v426
        %vm433 = vmor %vm431, %vm432
        %v434 = vsel %vm433, %v426, %v430
        %v435 = vand.u32 2147483647, %v425
        %vm436 = vcmp.eq.f32.partialorder %v435, 8.507059e+37
        %v437 = vand.u32 %v425, 2147483648
        %v438 = vor.u32 1.1754944e-38, %v437
        %v439 = vsel %vm436, %v438, %v434
        %v440 = vmul.f32 1.0, %v439
        %v441 = vmul.f32 %v336, %v440
        %442 = vst [vmem:[%s318] sm:$0xf] %v441
        %s443 = sand.u32 %s206, 1
        %s444 = scalar_lea.sflag [#allocation4], %s443
        %s445 = sand.u32 %s206, 1
        %s446 = smul.addr %s445, 4
        %s447 = scalar_lea.vmem [#allocation3], %s446
        // Predicated region
        $region49: #{tpu_custom_call.1} parent=47 // pred_check
          %p448 = pneg %p216
        $region50: #{tpu_custom_call.1} parent=47 // pred_check_branch
          %450 = sbr.rel (%p448) target = $region52
        $region51: #{tpu_custom_call.1} parent=47 // pred_region
          %452 = vsyncadd %s444, 0
          %s453 = smul.addr %s27, 2
          %s454 = sadd.s32 %s28, %s453
          %s455 = smul.addr %s454, 4
          %s456 = scalar_lea.hbm %s7, %s455
          %s458 = sshll.u32 %s447, 4
          %s459 = int_to_ptr.vmem [resolvable:$true] %s458
          %s460 = sshll.u32 %s456, 4
          %s461 = int_to_ptr.hbm [resolvable:$true] %s460
          %463 = dma.vmem_to_hbm [thread:$0]  %s459, 64, %s461, %s444
        $region52: #{tpu_custom_call.1} parent=47 // pred_fallthru
          _
      $region48: #{tpu_custom_call.1} parent=5 // pred_fallthru
        _
      %p464 = scmp.le.s32.totalorder 2, %s18
      // Predicated region
      $region53: #{tpu_custom_call.1} parent=5 // pred_check
        %p465 = pneg %p464
      $region54: #{tpu_custom_call.1} parent=5 // pred_check_branch
        %467 = sbr.rel (%p465) target = $region56
      $region55: #{tpu_custom_call.1} parent=5 // pred_region
        %s468 = ssub.s32 %s18, 2
        // Predicated region
        $region57: #{tpu_custom_call.1} parent=55 // pred_check
          %p469 = pneg %p222
        $region58: #{tpu_custom_call.1} parent=55 // pred_check_branch
          %471 = sbr.rel (%p469) target = $region60
        $region59: #{tpu_custom_call.1} parent=55 // pred_region
          %s472 = sand.u32 %s207, 1
          %s473 = scalar_lea.sflag [#allocation4], %s472
          %s474 = sand.u32 %s207, 1
          %s475 = smul.addr %s474, 4
          %s476 = scalar_lea.vmem [#allocation3], %s475
          %478 = dma.done %s473, 64
        $region60: #{tpu_custom_call.1} parent=55 // pred_fallthru
          _
      $region56: #{tpu_custom_call.1} parent=5 // pred_fallthru
        _
    $region6: #{tpu_custom_call.1} parent=1 // loop_footer
      %s22 = sadd.s32 1, %s18
    $region7: #{tpu_custom_call.1} parent=1 // loop_footer_branch
      %17 = sbr.rel target = $region3
    $region8: #{tpu_custom_call.1} parent=1 // loop_exit
      _
    %479 = vsyncpa [#allocation4], 1
    %s480 = scalar_lea.sflag [#allocation4], 1
    %481 = vsyncpa %s480, 1

</llo_original>
